<compile_context>
chip_gen: v6e
topology: v6e:2x2x1
jax: 0.10.0
libtpu: 0.0.40
codegen_flags: <defaults>
</compile_context>

<pallas_src>
import jax
import jax.numpy as jnp
from jax.experimental import pallas as pl
from jax.experimental.pallas import tpu as pltpu


def _dqn_kernel(x_ref, w1_ref, b1_ref, w2_ref, b2_ref, w3_ref, b3_ref, o_ref):
    # Weights may be f32 or bf16; activations are cast to the weight dtype for
    # the MXU matmuls, accumulation and bias-add/ReLU stay in f32.
    cdt = w1_ref.dtype
    x = x_ref[...].astype(cdt)

    # fc1 + ReLU
    h1 = jnp.dot(x, w1_ref[...], preferred_element_type=jnp.float32) + b1_ref[...]
    h1 = jnp.maximum(h1, 0.0).astype(cdt)

    # fc2 + ReLU
    h2 = jnp.dot(h1, w2_ref[...], preferred_element_type=jnp.float32) + b2_ref[...]
    h2 = jnp.maximum(h2, 0.0).astype(cdt)

    # fc3 (lane-padded to 128 output columns; padding columns are zero)
    out = jnp.dot(h2, w3_ref[...], preferred_element_type=jnp.float32) + b3_ref[...]

    o_ref[...] = out.astype(o_ref.dtype)


def dqn_forward(x, params, *, tm=512, weight_dtype=jnp.float32):
    """x: [B, n_obs] float32. params: dict of w1,b1,w2,b2,w3,b3 ([in,out] weights)."""
    w1, b1 = params["w1"], params["b1"]
    w2, b2 = params["w2"], params["b2"]
    w3, b3 = params["w3"], params["b3"]
    B, n_obs = x.shape
    hidden = w1.shape[1]
    n_actions = w3.shape[1]

    # --- lane-dense fc3: zero-pad output columns up to a multiple of 128 ---
    n_out_pad = max(128, ((n_actions + 127) // 128) * 128)
    w3p = jnp.zeros((hidden, n_out_pad), w3.dtype).at[:, :n_actions].set(w3)
    b3p = jnp.zeros((1, n_out_pad), b3.dtype).at[:, :n_actions].set(b3)

    # Optional bf16 weight packing (v6e/v7x). Biases stay f32.
    w1c = w1.astype(weight_dtype)
    w2c = w2.astype(weight_dtype)
    w3c = w3p.astype(weight_dtype)

    # --- batch tiling: tm rows per grid step, pad B to a multiple of tm ---
    tm = max(8, min(int(tm), ((B + 7) // 8) * 8))
    tm = ((tm + 7) // 8) * 8                      # sublane-aligned tile
    B_pad = ((B + tm - 1) // tm) * tm
    xp = x if B_pad == B else jnp.pad(x, ((0, B_pad - B), (0, 0)))

    grid = (B_pad // tm,)

    out_padded = pl.pallas_call(
        _dqn_kernel,
        out_shape=jax.ShapeDtypeStruct((B_pad, n_out_pad), jnp.float32),
        grid=grid,
        in_specs=[
            pl.BlockSpec((tm, n_obs), lambda i: (i, 0)),         # x tile
            pl.BlockSpec((n_obs, hidden), lambda i: (0, 0)),     # w1 (resident)
            pl.BlockSpec((1, hidden), lambda i: (0, 0)),         # b1
            pl.BlockSpec((hidden, hidden), lambda i: (0, 0)),    # w2
            pl.BlockSpec((1, hidden), lambda i: (0, 0)),         # b2
            pl.BlockSpec((hidden, n_out_pad), lambda i: (0, 0)), # w3 (padded)
            pl.BlockSpec((1, n_out_pad), lambda i: (0, 0)),      # b3 (padded)
        ],
        out_specs=pl.BlockSpec((tm, n_out_pad), lambda i: (i, 0)),
        compiler_params=pltpu.CompilerParams(
            dimension_semantics=("parallel",),  # batch axis -> both TCs on v7x
        ),
    )(xp, w1c, b1, w2c, b2, w3c, b3p)

    return out_padded[:B, :n_actions]


def init_params(key, n_observations, n_actions, hidden=128):
    """Deterministic synthetic init (PyTorch-style uniform fan-in bound)."""
    ks = jax.random.split(key, 6)

    def linear(kw, kb, fan_in, fan_out):
        bound = 1.0 / jnp.sqrt(fan_in)
        # stored as [in, out] (transpose of torch's [out, in])
        w = jax.random.uniform(kw, (fan_in, fan_out), jnp.float32, -bound, bound)
        b = jax.random.uniform(kb, (1, fan_out), jnp.float32, -bound, bound)
        return w, b

    w1, b1 = linear(ks[0], ks[1], n_observations, hidden)
    w2, b2 = linear(ks[2], ks[3], hidden, hidden)
    w3, b3 = linear(ks[4], ks[5], hidden, n_actions)
    return {"w1": w1, "b1": b1, "w2": w2, "b2": b2, "w3": w3, "b3": b3}


def dqn_reference(x, p, weight_dtype=jnp.float32):
    """Pure-JAX reference mirroring the kernel's mixed-precision choices."""
    def dot(a, w):
        return jnp.dot(a.astype(weight_dtype), w.astype(weight_dtype),
                       preferred_element_type=jnp.float32)
    h1 = jnp.maximum(dot(x, p["w1"]) + p["b1"], 0.0)
    h2 = jnp.maximum(dot(h1, p["w2"]) + p["b2"], 0.0)
    return dot(h2, p["w3"]) + p["b3"]


if __name__ == "__main__":
    # Lunar lander: 8 observations, 4 actions. Small batch; tm=64 gives a
    # 2-step "parallel" batch grid so the tiling path is exercised.
    n_observations, n_actions, batch = 8, 4, 128

    key = jax.random.PRNGKey(0)
    k_params, k_x = jax.random.split(key)
    params = init_params(k_params, n_observations, n_actions)
    x = jax.random.normal(k_x, (batch, n_observations), jnp.float32)

    # f32 path (v5e-safe default)
    out = jax.block_until_ready(dqn_forward(x, params, tm=64))
    ref = dqn_reference(x, params)
    assert out.shape == (batch, n_actions), out.shape
    assert jnp.allclose(out, ref, atol=1e-5, rtol=1e-5), "f32 mismatch vs reference"

    # bf16-weight path (v6e/v7x MXU-native); compared against a matching
    # mixed-precision reference with a relaxed tolerance.
    out_bf16 = jax.block_until_ready(
        dqn_forward(x, params, tm=64, weight_dtype=jnp.bfloat16))
    ref_bf16 = dqn_reference(x, params, weight_dtype=jnp.bfloat16)
    assert out_bf16.shape == (batch, n_actions), out_bf16.shape
    assert jnp.allclose(out_bf16, ref_bf16, atol=1e-2, rtol=1e-2), \
        "bf16 mismatch vs reference"

    print("KERNEL_OK")
</pallas_src>

<mosaic_0001>
module attributes {stable_mosaic.version = 11 : i64} {
  func.func @_dqn_kernel(%arg0: i32, %arg1: memref<64x8xf32, #tpu.memory_space<vmem>>, %arg2: memref<8x128xf32, #tpu.memory_space<vmem>>, %arg3: memref<1x128xf32, #tpu.memory_space<vmem>>, %arg4: memref<128x128xf32, #tpu.memory_space<vmem>>, %arg5: memref<1x128xf32, #tpu.memory_space<vmem>>, %arg6: memref<128x128xf32, #tpu.memory_space<vmem>>, %arg7: memref<1x128xf32, #tpu.memory_space<vmem>>, %arg8: memref<64x128xf32, #tpu.memory_space<vmem>>) attributes {dimension_semantics = [#tpu.dimension_semantics<parallel>], iteration_bounds = array<i64: 2>, scalar_prefetch = 0 : i64, scratch_operands = 0 : i64, tpu.core_type = #tpu.core_type<tc>, window_params = [{transform_indices = @transform_0, window_bounds = array<i64: 64, 8>}, {pipeline_mode = #tpu.pipeline_mode<synchronous>, transform_indices = @transform_1, window_bounds = array<i64: 8, 128>}, {pipeline_mode = #tpu.pipeline_mode<synchronous>, transform_indices = @transform_2, window_bounds = array<i64: 1, 128>}, {pipeline_mode = #tpu.pipeline_mode<synchronous>, transform_indices = @transform_3, window_bounds = array<i64: 128, 128>}, {pipeline_mode = #tpu.pipeline_mode<synchronous>, transform_indices = @transform_4, window_bounds = array<i64: 1, 128>}, {pipeline_mode = #tpu.pipeline_mode<synchronous>, transform_indices = @transform_5, window_bounds = array<i64: 128, 128>}, {pipeline_mode = #tpu.pipeline_mode<synchronous>, transform_indices = @transform_6, window_bounds = array<i64: 1, 128>}, {transform_indices = @transform_7, window_bounds = array<i64: 64, 128>}]} {
    %c0 = arith.constant 0 : index
    %c0_0 = arith.constant 0 : index
    %0 = vector.load %arg1[%c0, %c0_0] : memref<64x8xf32, #tpu.memory_space<vmem>>, vector<64x8xf32>
    %c0_1 = arith.constant 0 : index
    %c0_2 = arith.constant 0 : index
    %1 = vector.load %arg2[%c0_1, %c0_2] : memref<8x128xf32, #tpu.memory_space<vmem>>, vector<8x128xf32>
    %cst = arith.constant dense<0.000000e+00> : vector<64x128xf32>
    %2 = tpu.matmul %0, %1, %cst {dimension_numbers = #tpu.dot_dimension_numbers<[1], [0], [0], [1], [0, 0, 1, 1], [], []>} : vector<64x8xf32>, vector<8x128xf32>, vector<64x128xf32> -> vector<64x128xf32>
    %c0_3 = arith.constant 0 : index
    %c0_4 = arith.constant 0 : index
    %3 = vector.load %arg3[%c0_3, %c0_4] : memref<1x128xf32, #tpu.memory_space<vmem>>, vector<1x128xf32>
    %4 = vector.broadcast %3 : vector<1x128xf32> to vector<64x128xf32>
    %5 = arith.addf %2, %4 : vector<64x128xf32>
    %cst_5 = arith.constant 0.000000e+00 : f32
    %6 = vector.broadcast %cst_5 : f32 to vector<64x128xf32>
    %7 = arith.maximumf %5, %6 : vector<64x128xf32>
    %c0_6 = arith.constant 0 : index
    %c0_7 = arith.constant 0 : index
    %8 = vector.load %arg4[%c0_6, %c0_7] : memref<128x128xf32, #tpu.memory_space<vmem>>, vector<128x128xf32>
    %cst_8 = arith.constant dense<0.000000e+00> : vector<64x128xf32>
    %9 = tpu.matmul %7, %8, %cst_8 {dimension_numbers = #tpu.dot_dimension_numbers<[1], [0], [0], [1], [0, 0, 1, 1], [], []>} : vector<64x128xf32>, vector<128x128xf32>, vector<64x128xf32> -> vector<64x128xf32>
    %c0_9 = arith.constant 0 : index
    %c0_10 = arith.constant 0 : index
    %10 = vector.load %arg5[%c0_9, %c0_10] : memref<1x128xf32, #tpu.memory_space<vmem>>, vector<1x128xf32>
    %11 = vector.broadcast %10 : vector<1x128xf32> to vector<64x128xf32>
    %12 = arith.addf %9, %11 : vector<64x128xf32>
    %cst_11 = arith.constant 0.000000e+00 : f32
    %13 = vector.broadcast %cst_11 : f32 to vector<64x128xf32>
    %14 = arith.maximumf %12, %13 : vector<64x128xf32>
    %c0_12 = arith.constant 0 : index
    %c0_13 = arith.constant 0 : index
    %15 = vector.load %arg6[%c0_12, %c0_13] : memref<128x128xf32, #tpu.memory_space<vmem>>, vector<128x128xf32>
    %cst_14 = arith.constant dense<0.000000e+00> : vector<64x128xf32>
    %16 = tpu.matmul %14, %15, %cst_14 {dimension_numbers = #tpu.dot_dimension_numbers<[1], [0], [0], [1], [0, 0, 1, 1], [], []>} : vector<64x128xf32>, vector<128x128xf32>, vector<64x128xf32> -> vector<64x128xf32>
    %c0_15 = arith.constant 0 : index
    %c0_16 = arith.constant 0 : index
    %17 = vector.load %arg7[%c0_15, %c0_16] : memref<1x128xf32, #tpu.memory_space<vmem>>, vector<1x128xf32>
    %18 = vector.broadcast %17 : vector<1x128xf32> to vector<64x128xf32>
    %19 = arith.addf %16, %18 : vector<64x128xf32>
    %c0_17 = arith.constant 0 : index
    %c0_18 = arith.constant 0 : index
    %20 = vector.load %arg8[%c0_17, %c0_18] : memref<64x128xf32, #tpu.memory_space<vmem>>, vector<64x128xf32>
    tpu.vector_store %arg8[%c0_17, %c0_18], %19 {strides = array<i32>} : memref<64x128xf32, #tpu.memory_space<vmem>>, vector<64x128xf32>,
    return
  }
  func.func @transform_0(%arg0: i32) -> (i32, i32) {
    %c0_i32 = arith.constant 0 : i32
    %c0_i32_0 = arith.constant 0 : i32
    return %arg0, %c0_i32 : i32, i32
  }
  func.func @transform_1(%arg0: i32) -> (i32, i32) {
    %c0_i32 = arith.constant 0 : i32
    %c0_i32_0 = arith.constant 0 : i32
    %c0_i32_1 = arith.constant 0 : i32
    return %c0_i32, %c0_i32_0 : i32, i32
  }
  func.func @transform_2(%arg0: i32) -> (i32, i32) {
    %c0_i32 = arith.constant 0 : i32
    %c0_i32_0 = arith.constant 0 : i32
    %c0_i32_1 = arith.constant 0 : i32
    return %c0_i32, %c0_i32_0 : i32, i32
  }
  func.func @transform_3(%arg0: i32) -> (i32, i32) {
    %c0_i32 = arith.constant 0 : i32
    %c0_i32_0 = arith.constant 0 : i32
    %c0_i32_1 = arith.constant 0 : i32
    return %c0_i32, %c0_i32_0 : i32, i32
  }
  func.func @transform_4(%arg0: i32) -> (i32, i32) {
    %c0_i32 = arith.constant 0 : i32
    %c0_i32_0 = arith.constant 0 : i32
    %c0_i32_1 = arith.constant 0 : i32
    return %c0_i32, %c0_i32_0 : i32, i32
  }
  func.func @transform_5(%arg0: i32) -> (i32, i32) {
    %c0_i32 = arith.constant 0 : i32
    %c0_i32_0 = arith.constant 0 : i32
    %c0_i32_1 = arith.constant 0 : i32
    return %c0_i32, %c0_i32_0 : i32, i32
  }
  func.func @transform_6(%arg0: i32) -> (i32, i32) {
    %c0_i32 = arith.constant 0 : i32
    %c0_i32_0 = arith.constant 0 : i32
    %c0_i32_1 = arith.constant 0 : i32
    return %c0_i32, %c0_i32_0 : i32, i32
  }
  func.func @transform_7(%arg0: i32) -> (i32, i32) {
    %c0_i32 = arith.constant 0 : i32
    %c0_i32_0 = arith.constant 0 : i32
    return %arg0, %c0_i32 : i32, i32
  }
}

</mosaic_0001>

<llo_original>
// kernel: tpu_custom_call.1
$region0: #{tpu_custom_call.1}
  #allocation0 [shape = 'u32[]', space=smem, size = 0x4, offset = 0x4, fixed_abs, tag = 'smem constant byte address 0x4 - core index']
  #allocation1 [shape = 'u32[144,128]{1,0:T(1,128)}', space=vmem, size = 0x12000, scoped, tag = 'internal scratch']
  %s0 = inlined_call_operand.vmem [shape: f32[128,8], index: 0, kind: input, shape index: {}]
  %s1 = inlined_call_operand.vmem [shape: f32[8,128], index: 1, kind: input, shape index: {}]
  %s2 = inlined_call_operand.vmem [shape: f32[1,128], index: 2, kind: input, shape index: {}]
  %s3 = inlined_call_operand.vmem [shape: f32[128,128], index: 3, kind: input, shape index: {}]
  %s4 = inlined_call_operand.vmem [shape: f32[1,128], index: 4, kind: input, shape index: {}]
  %s5 = inlined_call_operand.hbm [shape: f32[128,128], index: 5, kind: input, shape index: {}]
  %s6 = inlined_call_operand.vmem [shape: f32[1,128], index: 6, kind: input, shape index: {}]
  %s7 = inlined_call_operand.hbm [shape: f32[128,128], index: 7, kind: output, shape index: {}]
  %s8 = sld [smem:[#allocation0]]
  $region65: #{tpu_custom_call.1} parent=0
    _
  %s10 = ssub.s32 1, %s8
  %s11 = scalar_select 0, %s10, %s8
  $region1: #{tpu_custom_call.1} parent=0
    #allocation2 [shape = 'u8[65536]{0}', space=vmem, size = 0x10000, scoped, tag = 'input window, operand 5, single buffered']
    #allocation3 [shape = 's32[2]{0}', space=sflag, size = 0x8, scoped, tag = 'scoped memory for tpu_custom_call.1']
    #allocation4 [shape = 's32[2]{0}', space=sflag, size = 0x8, scoped, tag = 'scoped memory for tpu_custom_call.1']
    #allocation5 [shape = 'u8[65536]{0}', space=vmem, size = 0x10000, scoped, tag = 'output window, operand 0']
    %12 = vsyncpa [#allocation3], 0
    %13 = vsyncpa [#allocation4], 0
    %s14 = scalar_lea.sflag [#allocation4], 1
    %15 = vsyncpa %s14, 0
    loop: start=0, step=1, limit=4
    $region2: #{tpu_custom_call.1} parent=1 // loop_pre_header
      _
    $region3: #{tpu_custom_call.1} parent=1 // loop_header
      %s17 = sphi 0, %s21
      %p18 = scmp.ge.s32.totalorder %s17, 4
      %s27 = sphi 0, %s29
      %s30 = sphi 0, %s27
      %s31 = sphi 0, %s30
      %s47 = sphi 0, %s31
      %s51 = sphi 0, %s51
      %s53 = sphi 0, %s51
      %s54 = sphi 0, %s53
      %s68 = sphi 0, %s54
      %s72 = sphi 0, %s72
      %s74 = sphi 0, %s72
      %s75 = sphi 0, %s74
      %s89 = sphi 0, %s75
      %s93 = sphi 0, %s93
      %s95 = sphi 0, %s93
      %s96 = sphi 0, %s95
      %s110 = sphi 0, %s96
      %s114 = sphi 0, %s114
      %s116 = sphi 0, %s114
      %s117 = sphi 0, %s116
      %s131 = sphi 0, %s117
      %s135 = sphi 0, %s135
      %s137 = sphi 0, %s135
      %s138 = sphi 0, %s137
      %s152 = sphi 0, %s138
      %s156 = sphi 0, %s156
      %s158 = sphi 0, %s156
      %s159 = sphi 0, %s158
      %s173 = sphi 0, %s159
      %s179 = sphi 0, %s181
      %s182 = sphi 0, %s179
      %s183 = sphi 0, %s182
      %s199 = sphi 0, %s183
    $region4: #{tpu_custom_call.1} parent=1 // loop_header_branch
      %20 = sbr.rel (%p18) target = $region8
    $region5: #{tpu_custom_call.1} parent=1 // loop_body
      %s22 = ssub.s32 %s17, 1
      %s23 = ssub.s32 %s17, 2
      %s24 = sadd.s32 %s17, 1
      %s25 = ssub.s32 %s17, %s24
      %p26 = scmp.eq.s32.totalorder %s25, 0
      %s28 = sadd.s32 %s27, 1
      %s29 = scalar_select %p26, %s27, %s28
      %p32 = pneg %p26
      %p33 = scmp.eq.s32.totalorder %s17, 1
      %p34 = por %p32, %p33
      %p35 = scmp.ne.s32.totalorder %s27, %s30
      %p36 = scmp.eq.s32.totalorder %s17, 0
      %p37 = por %p35, %p36
      %p38 = scmp.ne.s32.totalorder %s27, %s30
      %p39 = scmp.eq.s32.totalorder %s22, 1
      %p40 = por %p38, %p39
      %p41 = scmp.ne.s32.totalorder %s30, %s31
      %p42 = scmp.eq.s32.totalorder %s22, 0
      %p43 = por %p41, %p42
      %p44 = scmp.ne.s32.totalorder %s30, %s31
      %p45 = scmp.eq.s32.totalorder %s23, 1
      %p46 = por %p44, %p45
      %p48 = scmp.ne.s32.totalorder %s31, %s47
      %p49 = scmp.eq.s32.totalorder %s23, 0
      %p50 = por %p48, %p49
      %s52 = sadd.s32 %s51, 1
      %p55 = scmp.eq.s32.totalorder %s17, 1
      %p56 = scmp.ne.s32.totalorder %s51, %s53
      %p57 = scmp.eq.s32.totalorder %s17, 0
      %p58 = por %p56, %p57
      %p59 = scmp.ne.s32.totalorder %s51, %s53
      %p60 = scmp.eq.s32.totalorder %s22, 1
      %p61 = por %p59, %p60
      %p62 = scmp.ne.s32.totalorder %s53, %s54
      %p63 = scmp.eq.s32.totalorder %s22, 0
      %p64 = por %p62, %p63
      %p65 = scmp.ne.s32.totalorder %s53, %s54
      %p66 = scmp.eq.s32.totalorder %s23, 1
      %p67 = por %p65, %p66
      %p69 = scmp.ne.s32.totalorder %s54, %s68
      %p70 = scmp.eq.s32.totalorder %s23, 0
      %p71 = por %p69, %p70
      %s73 = sadd.s32 %s72, 1
      %p76 = scmp.eq.s32.totalorder %s17, 1
      %p77 = scmp.ne.s32.totalorder %s72, %s74
      %p78 = scmp.eq.s32.totalorder %s17, 0
      %p79 = por %p77, %p78
      %p80 = scmp.ne.s32.totalorder %s72, %s74
      %p81 = scmp.eq.s32.totalorder %s22, 1
      %p82 = por %p80, %p81
      %p83 = scmp.ne.s32.totalorder %s74, %s75
      %p84 = scmp.eq.s32.totalorder %s22, 0
      %p85 = por %p83, %p84
      %p86 = scmp.ne.s32.totalorder %s74, %s75
      %p87 = scmp.eq.s32.totalorder %s23, 1
      %p88 = por %p86, %p87
      %p90 = scmp.ne.s32.totalorder %s75, %s89
      %p91 = scmp.eq.s32.totalorder %s23, 0
      %p92 = por %p90, %p91
      %s94 = sadd.s32 %s93, 1
      %p97 = scmp.eq.s32.totalorder %s17, 1
      %p98 = scmp.ne.s32.totalorder %s93, %s95
      %p99 = scmp.eq.s32.totalorder %s17, 0
      %p100 = por %p98, %p99
      %p101 = scmp.ne.s32.totalorder %s93, %s95
      %p102 = scmp.eq.s32.totalorder %s22, 1
      %p103 = por %p101, %p102
      %p104 = scmp.ne.s32.totalorder %s95, %s96
      %p105 = scmp.eq.s32.totalorder %s22, 0
      %p106 = por %p104, %p105
      %p107 = scmp.ne.s32.totalorder %s95, %s96
      %p108 = scmp.eq.s32.totalorder %s23, 1
      %p109 = por %p107, %p108
      %p111 = scmp.ne.s32.totalorder %s96, %s110
      %p112 = scmp.eq.s32.totalorder %s23, 0
      %p113 = por %p111, %p112
      %s115 = sadd.s32 %s114, 1
      %p118 = scmp.eq.s32.totalorder %s17, 1
      %p119 = scmp.ne.s32.totalorder %s114, %s116
      %p120 = scmp.eq.s32.totalorder %s17, 0
      %p121 = por %p119, %p120
      %p122 = scmp.ne.s32.totalorder %s114, %s116
      %p123 = scmp.eq.s32.totalorder %s22, 1
      %p124 = por %p122, %p123
      %p125 = scmp.ne.s32.totalorder %s116, %s117
      %p126 = scmp.eq.s32.totalorder %s22, 0
      %p127 = por %p125, %p126
      %p128 = scmp.ne.s32.totalorder %s116, %s117
      %p129 = scmp.eq.s32.totalorder %s23, 1
      %p130 = por %p128, %p129
      %p132 = scmp.ne.s32.totalorder %s117, %s131
      %p133 = scmp.eq.s32.totalorder %s23, 0
      %p134 = por %p132, %p133
      %s136 = sadd.s32 %s135, 1
      %p139 = scmp.eq.s32.totalorder %s17, 1
      %p140 = scmp.ne.s32.totalorder %s135, %s137
      %p141 = scmp.eq.s32.totalorder %s17, 0
      %p142 = por %p140, %p141
      %p143 = scmp.ne.s32.totalorder %s135, %s137
      %p144 = scmp.eq.s32.totalorder %s22, 1
      %p145 = por %p143, %p144
      %p146 = scmp.ne.s32.totalorder %s137, %s138
      %p147 = scmp.eq.s32.totalorder %s22, 0
      %p148 = por %p146, %p147
      %p149 = scmp.ne.s32.totalorder %s137, %s138
      %p150 = scmp.eq.s32.totalorder %s23, 1
      %p151 = por %p149, %p150
      %p153 = scmp.ne.s32.totalorder %s138, %s152
      %p154 = scmp.eq.s32.totalorder %s23, 0
      %p155 = por %p153, %p154
      %s157 = sadd.s32 %s156, 1
      %p160 = scmp.eq.s32.totalorder %s17, 1
      %p161 = scmp.ne.s32.totalorder %s156, %s158
      %p162 = scmp.eq.s32.totalorder %s17, 0
      %p163 = por %p161, %p162
      %p164 = scmp.ne.s32.totalorder %s156, %s158
      %p165 = scmp.eq.s32.totalorder %s22, 1
      %p166 = por %p164, %p165
      %p167 = scmp.ne.s32.totalorder %s158, %s159
      %p168 = scmp.eq.s32.totalorder %s22, 0
      %p169 = por %p167, %p168
      %p170 = scmp.ne.s32.totalorder %s158, %s159
      %p171 = scmp.eq.s32.totalorder %s23, 1
      %p172 = por %p170, %p171
      %p174 = scmp.ne.s32.totalorder %s159, %s173
      %p175 = scmp.eq.s32.totalorder %s23, 0
      %p176 = por %p174, %p175
      %s177 = ssub.s32 %s17, %s24
      %p178 = scmp.eq.s32.totalorder %s177, 0
      %s180 = sadd.s32 %s179, 1
      %s181 = scalar_select %p178, %s179, %s180
      %p184 = pneg %p178
      %p185 = scmp.eq.s32.totalorder %s17, 1
      %p186 = por %p184, %p185
      %p187 = scmp.ne.s32.totalorder %s179, %s182
      %p188 = scmp.eq.s32.totalorder %s17, 0
      %p189 = por %p187, %p188
      %p190 = scmp.ne.s32.totalorder %s179, %s182
      %p191 = scmp.eq.s32.totalorder %s22, 1
      %p192 = por %p190, %p191
      %p193 = scmp.ne.s32.totalorder %s182, %s183
      %p194 = scmp.eq.s32.totalorder %s22, 0
      %p195 = por %p193, %p194
      %p196 = scmp.ne.s32.totalorder %s182, %s183
      %p197 = scmp.eq.s32.totalorder %s23, 1
      %p198 = por %p196, %p197
      %p200 = scmp.ne.s32.totalorder %s183, %s199
      %p201 = scmp.eq.s32.totalorder %s23, 0
      %p202 = por %p200, %p201
      %p203 = scmp.le.s32.totalorder 1, %s17
      %p204 = scmp.lt.s32.totalorder %s17, 3
      %p205 = pnand %p203, %p204
      %p206 = pneg %p205
      // Predicated region
      $region9: #{tpu_custom_call.1} parent=5 // pred_check
        _
      $region10: #{tpu_custom_call.1} parent=5 // pred_check_branch
        %208 = sbr.rel (%p205) target = $region12
      $region11: #{tpu_custom_call.1} parent=5 // pred_region
        %s209 = ssub.s32 %s17, 1
        // Predicated region
        $region13: #{tpu_custom_call.1} parent=11 // pred_check
          %p210 = pneg %p64
        $region14: #{tpu_custom_call.1} parent=11 // pred_check_branch
          %212 = sbr.rel (%p210) target = $region16
        $region15: #{tpu_custom_call.1} parent=11 // pred_region
          _
        $region16: #{tpu_custom_call.1} parent=11 // pred_fallthru
          _
        // Predicated region
        $region17: #{tpu_custom_call.1} parent=11 // pred_check
          %p213 = pneg %p85
        $region18: #{tpu_custom_call.1} parent=11 // pred_check_branch
          %215 = sbr.rel (%p213) target = $region20
        $region19: #{tpu_custom_call.1} parent=11 // pred_region
          _
        $region20: #{tpu_custom_call.1} parent=11 // pred_fallthru
          _
        // Predicated region
        $region21: #{tpu_custom_call.1} parent=11 // pred_check
          %p216 = pneg %p106
        $region22: #{tpu_custom_call.1} parent=11 // pred_check_branch
          %218 = sbr.rel (%p216) target = $region24
        $region23: #{tpu_custom_call.1} parent=11 // pred_region
          _
        $region24: #{tpu_custom_call.1} parent=11 // pred_fallthru
          _
        // Predicated region
        $region25: #{tpu_custom_call.1} parent=11 // pred_check
          %p219 = pneg %p127
        $region26: #{tpu_custom_call.1} parent=11 // pred_check_branch
          %221 = sbr.rel (%p219) target = $region28
        $region27: #{tpu_custom_call.1} parent=11 // pred_region
          _
        $region28: #{tpu_custom_call.1} parent=11 // pred_fallthru
          _
        // Predicated region
        $region29: #{tpu_custom_call.1} parent=11 // pred_check
          %p222 = pneg %p148
        $region30: #{tpu_custom_call.1} parent=11 // pred_check_branch
          %224 = sbr.rel (%p222) target = $region32
        $region31: #{tpu_custom_call.1} parent=11 // pred_region
          %s226 = ssub.s32 2048, 2048
          %227 = vsyncadd [#allocation3], %s226
          %s228 = sshll.u32 [#allocation2], 4
          %s229 = int_to_ptr.vmem [resolvable:$true] %s228
          %234 = dma.hbm_to_vmem [thread:$0]  %s5, 2048, %s229, [#allocation3], 128, 128, 8
        $region32: #{tpu_custom_call.1} parent=11 // pred_fallthru
          _
        // Predicated region
        $region33: #{tpu_custom_call.1} parent=11 // pred_check
          %p235 = pneg %p169
        $region34: #{tpu_custom_call.1} parent=11 // pred_check_branch
          %237 = sbr.rel (%p235) target = $region36
        $region35: #{tpu_custom_call.1} parent=11 // pred_region
          _
        $region36: #{tpu_custom_call.1} parent=11 // pred_fallthru
          _
      $region12: #{tpu_custom_call.1} parent=5 // pred_fallthru
        _
      %p238 = scmp.lt.s32.totalorder %s17, 2
      // Predicated region
      $region37: #{tpu_custom_call.1} parent=5 // pred_check
        %p239 = pneg %p238
      $region38: #{tpu_custom_call.1} parent=5 // pred_check_branch
        %241 = sbr.rel (%p239) target = $region40
      $region39: #{tpu_custom_call.1} parent=5 // pred_region
        // Predicated region
        $region41: #{tpu_custom_call.1} parent=39 // pred_check
          %p242 = pneg %p37
        $region42: #{tpu_custom_call.1} parent=39 // pred_check_branch
          %244 = sbr.rel (%p242) target = $region44
        $region43: #{tpu_custom_call.1} parent=39 // pred_region
          %s245 = smul.u32 8, %s17
          %p246 = scmp.lt.s32.totalorder %s245, 15
          %s247 = scalar_select %p246, %s245, 15
          %s248 = smul.addr %s247, 8
          %s249 = scalar_lea.vmem %s0, %s248
          %s250 = smul.u32 8, %s17
        $region44: #{tpu_custom_call.1} parent=39 // pred_fallthru
          _
      $region40: #{tpu_custom_call.1} parent=5 // pred_fallthru
        _
      %p251 = scmp.le.s32.totalorder 1, %s17
      %p252 = scmp.lt.s32.totalorder %s17, 3
      %p253 = pnand %p251, %p252
      %p254 = pneg %p253
      // Predicated region
      $region45: #{tpu_custom_call.1} parent=5 // pred_check
        _
      $region46: #{tpu_custom_call.1} parent=5 // pred_check_branch
        %256 = sbr.rel (%p253) target = $region48
      $region47: #{tpu_custom_call.1} parent=5 // pred_region
        %s257 = ssub.s32 %s17, 1
        // Predicated region
        $region49: #{tpu_custom_call.1} parent=47 // pred_check
          %p258 = pneg %p148
        $region50: #{tpu_custom_call.1} parent=47 // pred_check_branch
          %260 = sbr.rel (%p258) target = $region52
        $region51: #{tpu_custom_call.1} parent=47 // pred_region
          %261 = dma.done [#allocation3], 2048
        $region52: #{tpu_custom_call.1} parent=47 // pred_fallthru
          _
        %s262 = smul.u32 8, %s22
        %p263 = scmp.lt.s32.totalorder %s262, 15
        %s264 = scalar_select %p263, %s262, 15
        %s265 = smul.addr %s264, 8
        %s266 = scalar_lea.vmem %s0, %s265
        %p267 = pneg %p43
        %p268 = pneg %p40
        %p269 = pneg %p64
        %p270 = pneg %p61
        %p271 = pneg %p85
        %p272 = pneg %p82
        %p273 = pneg %p106
        %p274 = pneg %p103
        %p275 = pneg %p127
        %p276 = pneg %p124
        %p277 = pneg %p148
        %p278 = pneg %p145
        %p279 = pneg %p169
        %p280 = pneg %p166
        %p281 = pneg %p195
        %p282 = pneg %p192
        %s283 = sand.u32 %s182, 1
        %s284 = scalar_lea.sflag [#allocation4], %s283
        %s285 = sand.u32 %s182, 1
        %s286 = smul.addr %s285, 64
        %s287 = scalar_lea.vmem [#allocation5], %s286
        %s288 = smul.u32 8, %s22
        %p289 = scmp.lt.s32.totalorder %s288, 15
        %s290 = scalar_select %p289, %s288, 15
        %s291 = smul.addr %s290, 8
        %s292 = scalar_lea.vmem %s0, %s291
        %s293 = smul.u32 8, %s22
        %s294 = smul.u32 8, %s22
        %v295 = vld [vmem:[%s292] sm:$0xff]
        %v296 = vld [vmem:[%s292 + $0x8] sm:$0xff]
        %v297 = vld [vmem:[%s292 + $0x10] sm:$0xff]
        %v298 = vld [vmem:[%s292 + $0x18] sm:$0xff]
        %v299 = vld [vmem:[%s292 + $0x20] sm:$0xff]
        %v300 = vld [vmem:[%s292 + $0x28] sm:$0xff]
        %v301 = vld [vmem:[%s292 + $0x30] sm:$0xff]
        %v302 = vld [vmem:[%s292 + $0x38] sm:$0xff]
        %v303 = vld [vmem:[%s1] sm:$0xff]
        %v304 = vld [vmem:[%s2] sm:$0x1]
        %v306 = vlaneseq
        %v307 = vshrl.u32 %v306, 7
        %v308 = vsub.s32 0, %v307
        %v309 = vrot.slane %v304, %v308
        %vm311 = vcmask 64512
        %v313 = vsel %vm311, %v295, 0
        %v316 = vsel %vm311, %v296, 0
        %v319 = vsel %vm311, %v297, 0
        %v322 = vsel %vm311, %v298, 0
        %v325 = vsel %vm311, %v299, 0
        %v328 = vsel %vm311, %v300, 0
        %v331 = vsel %vm311, %v301, 0
        %v334 = vsel %vm311, %v302, 0
        %336 = vmatprep.subr.mxu0 0.0
        %337 = vmatpush1.msra.mxu0 0.0
        %338 = vmatprep.subr.mxu0 0.0
        %339 = vmatpush1.msra.mxu0 0.0
        %340 = vmatprep.subr.mxu0 0.0
        %341 = vmatpush1.msra.mxu0 0.0
        %342 = vmatprep.subr.mxu0 0.0
        %343 = vmatpush1.msra.mxu0 0.0
        %344 = vmatprep.subr.mxu0 0.0
        %345 = vmatpush1.msra.mxu0 0.0
        %346 = vmatprep.subr.mxu0 0.0
        %347 = vmatpush1.msra.mxu0 0.0
        %348 = vmatprep.subr.mxu0 0.0
        %349 = vmatpush1.msra.mxu0 0.0
        %350 = vmatprep.subr.mxu0 0.0
        %351 = vmatpush1.msra.mxu0 0.0
        %352 = vmatprep.subr.mxu0 0.0
        %353 = vmatpush1.msra.mxu0 0.0
        %354 = vmatprep.subr.mxu0 0.0
        %355 = vmatpush1.msra.mxu0 0.0
        %356 = vmatprep.subr.mxu0 0.0
        %357 = vmatpush1.msra.mxu0 0.0
        %358 = vmatprep.subr.mxu0 0.0
        %359 = vmatpush1.msra.mxu0 0.0
        %360 = vmatprep.subr.mxu0 0.0
        %361 = vmatpush1.msra.mxu0 0.0
        %362 = vmatprep.subr.mxu0 0.0
        %363 = vmatpush1.msra.mxu0 0.0
        %364 = vmatprep.subr.mxu0 0.0
        %365 = vmatpush1.msra.mxu0 0.0
        %366 = vmatprep.subr.mxu0 0.0
        %367 = vmatpush1.msra.mxu0 %v303
        %368 = vmatprep.subr.mxu0 0.0
        %369 = vmatpush2.msra.mxu0 0.0
        %370 = vmatprep.subr.mxu0 0.0
        %371 = vmatpush2.msra.mxu0 0.0
        %372 = vmatprep.subr.mxu0 0.0
        %373 = vmatpush2.msra.mxu0 0.0
        %374 = vmatprep.subr.mxu0 0.0
        %375 = vmatpush2.msra.mxu0 0.0
        %376 = vmatprep.subr.mxu0 0.0
        %377 = vmatpush2.msra.mxu0 0.0
        %378 = vmatprep.subr.mxu0 0.0
        %379 = vmatpush2.msra.mxu0 0.0
        %380 = vmatprep.subr.mxu0 0.0
        %381 = vmatpush2.msra.mxu0 0.0
        %382 = vmatprep.subr.mxu0 0.0
        %383 = vmatpush2.msra.mxu0 0.0
        %384 = vmatprep.subr.mxu0 0.0
        %385 = vmatpush2.msra.mxu0 0.0
        %386 = vmatprep.subr.mxu0 0.0
        %387 = vmatpush2.msra.mxu0 0.0
        %388 = vmatprep.subr.mxu0 0.0
        %389 = vmatpush2.msra.mxu0 0.0
        %390 = vmatprep.subr.mxu0 0.0
        %391 = vmatpush2.msra.mxu0 0.0
        %392 = vmatprep.subr.mxu0 0.0
        %393 = vmatpush2.msra.mxu0 0.0
        %394 = vmatprep.subr.mxu0 0.0
        %395 = vmatpush2.msra.mxu0 0.0
        %396 = vmatprep.subr.mxu0 0.0
        %397 = vmatpush2.msra.mxu0 0.0
        %398 = vmatprep.subr.mxu0 0.0
        %399 = vmatpush2.msra.mxu0 0.0
        %400 = vmatprep.mubr.f32.mxu0 0.0
        %401 = vmatmul.mubr.f32.gmra.mxu0 %v313
        %v402 = vpop.f32.mrf.mxu0
        %v403 = vadd.f32 %v309, %v402
        %v404 = vpop.f32.mrf.mxu0
        %405 = vmatprep.mubr.f32.mxu0 0.0
        %406 = vmatmul.mubr.f32.gmra.mxu0 %v316
        %v407 = vpop.f32.mrf.mxu0
        %v408 = vadd.f32 %v309, %v407
        %v409 = vpop.f32.mrf.mxu0
        %410 = vmatprep.mubr.f32.mxu0 0.0
        %411 = vmatmul.mubr.f32.gmra.mxu0 %v319
        %v412 = vpop.f32.mrf.mxu0
        %v413 = vadd.f32 %v309, %v412
        %v414 = vpop.f32.mrf.mxu0
        %415 = vmatprep.mubr.f32.mxu0 0.0
        %416 = vmatmul.mubr.f32.gmra.mxu0 %v322
        %v417 = vpop.f32.mrf.mxu0
        %v418 = vadd.f32 %v309, %v417
        %v419 = vpop.f32.mrf.mxu0
        %420 = vmatprep.mubr.f32.mxu0 0.0
        %421 = vmatmul.mubr.f32.gmra.mxu0 %v325
        %v422 = vpop.f32.mrf.mxu0
        %v423 = vadd.f32 %v309, %v422
        %v424 = vpop.f32.mrf.mxu0
        %425 = vmatprep.mubr.f32.mxu0 0.0
        %426 = vmatmul.mubr.f32.gmra.mxu0 %v328
        %v427 = vpop.f32.mrf.mxu0
        %v428 = vadd.f32 %v309, %v427
        %v429 = vpop.f32.mrf.mxu0
        %430 = vmatprep.mubr.f32.mxu0 0.0
        %431 = vmatmul.mubr.f32.gmra.mxu0 %v331
        %v432 = vpop.f32.mrf.mxu0
        %v433 = vadd.f32 %v309, %v432
        %v434 = vpop.f32.mrf.mxu0
        %435 = vmatprep.mubr.f32.mxu0 0.0
        %436 = vmatmul.mubr.f32.gmra.mxu0 %v334
        %v437 = vpop.f32.mrf.mxu0
        %v438 = vadd.f32 %v309, %v437
        %v439 = vpop.f32.mrf.mxu0
        %440 = vdwg.mxu0
        %v441 = vmax.f32 %v403, 0.0
        %v442 = vmax.f32 %v408, 0.0
        %v443 = vmax.f32 %v413, 0.0
        %v444 = vmax.f32 %v418, 0.0
        %v445 = vmax.f32 %v423, 0.0
        %v446 = vmax.f32 %v428, 0.0
        %v447 = vmax.f32 %v433, 0.0
        %v448 = vmax.f32 %v438, 0.0
        %v449 = vld [vmem:[%s3] sm:$0xff]
        %v450 = vld [vmem:[%s3 + $0x8] sm:$0xff]
        %v451 = vld [vmem:[%s3 + $0x10] sm:$0xff]
        %v452 = vld [vmem:[%s3 + $0x18] sm:$0xff]
        %v453 = vld [vmem:[%s3 + $0x20] sm:$0xff]
        %v454 = vld [vmem:[%s3 + $0x28] sm:$0xff]
        %v455 = vld [vmem:[%s3 + $0x30] sm:$0xff]
        %v456 = vld [vmem:[%s3 + $0x38] sm:$0xff]
        %v457 = vld [vmem:[%s3 + $0x40] sm:$0xff]
        %v458 = vld [vmem:[%s3 + $0x48] sm:$0xff]
        %v459 = vld [vmem:[%s3 + $0x50] sm:$0xff]
        %v460 = vld [vmem:[%s3 + $0x58] sm:$0xff]
        %v461 = vld [vmem:[%s3 + $0x60] sm:$0xff]
        %v462 = vld [vmem:[%s3 + $0x68] sm:$0xff]
        %v463 = vld [vmem:[%s3 + $0x70] sm:$0xff]
        %v464 = vld [vmem:[%s3 + $0x78] sm:$0xff]
        %v465 = vld [vmem:[%s4] sm:$0x1]
        %v467 = vlaneseq
        %v468 = vshrl.u32 %v467, 7
        %v469 = vsub.s32 0, %v468
        %v470 = vrot.slane %v465, %v469
        %472 = vmatprep.subr.mxu0 0.0
        %473 = vmatpush1.msra.mxu0 %v464
        %474 = vmatprep.subr.mxu0 0.0
        %475 = vmatpush1.msra.mxu0 %v463
        %476 = vmatprep.subr.mxu0 0.0
        %477 = vmatpush1.msra.mxu0 %v462
        %478 = vmatprep.subr.mxu0 0.0
        %479 = vmatpush1.msra.mxu0 %v461
        %480 = vmatprep.subr.mxu0 0.0
        %481 = vmatpush1.msra.mxu0 %v460
        %482 = vmatprep.subr.mxu0 0.0
        %483 = vmatpush1.msra.mxu0 %v459
        %484 = vmatprep.subr.mxu0 0.0
        %485 = vmatpush1.msra.mxu0 %v458
        %486 = vmatprep.subr.mxu0 0.0
        %487 = vmatpush1.msra.mxu0 %v457
        %488 = vmatprep.subr.mxu0 0.0
        %489 = vmatpush1.msra.mxu0 %v456
        %490 = vmatprep.subr.mxu0 0.0
        %491 = vmatpush1.msra.mxu0 %v455
        %492 = vmatprep.subr.mxu0 0.0
        %493 = vmatpush1.msra.mxu0 %v454
        %494 = vmatprep.subr.mxu0 0.0
        %495 = vmatpush1.msra.mxu0 %v453
        %496 = vmatprep.subr.mxu0 0.0
        %497 = vmatpush1.msra.mxu0 %v452
        %498 = vmatprep.subr.mxu0 0.0
        %499 = vmatpush1.msra.mxu0 %v451
        %500 = vmatprep.subr.mxu0 0.0
        %501 = vmatpush1.msra.mxu0 %v450
        %502 = vmatprep.subr.mxu0 0.0
        %503 = vmatpush1.msra.mxu0 %v449
        %504 = vmatprep.subr.mxu0 0.0
        %505 = vmatpush2.msra.mxu0 0.0
        %506 = vmatprep.subr.mxu0 0.0
        %507 = vmatpush2.msra.mxu0 0.0
        %508 = vmatprep.subr.mxu0 0.0
        %509 = vmatpush2.msra.mxu0 0.0
        %510 = vmatprep.subr.mxu0 0.0
        %511 = vmatpush2.msra.mxu0 0.0
        %512 = vmatprep.subr.mxu0 0.0
        %513 = vmatpush2.msra.mxu0 0.0
        %514 = vmatprep.subr.mxu0 0.0
        %515 = vmatpush2.msra.mxu0 0.0
        %516 = vmatprep.subr.mxu0 0.0
        %517 = vmatpush2.msra.mxu0 0.0
        %518 = vmatprep.subr.mxu0 0.0
        %519 = vmatpush2.msra.mxu0 0.0
        %520 = vmatprep.subr.mxu0 0.0
        %521 = vmatpush2.msra.mxu0 0.0
        %522 = vmatprep.subr.mxu0 0.0
        %523 = vmatpush2.msra.mxu0 0.0
        %524 = vmatprep.subr.mxu0 0.0
        %525 = vmatpush2.msra.mxu0 0.0
        %526 = vmatprep.subr.mxu0 0.0
        %527 = vmatpush2.msra.mxu0 0.0
        %528 = vmatprep.subr.mxu0 0.0
        %529 = vmatpush2.msra.mxu0 0.0
        %530 = vmatprep.subr.mxu0 0.0
        %531 = vmatpush2.msra.mxu0 0.0
        %532 = vmatprep.subr.mxu0 0.0
        %533 = vmatpush2.msra.mxu0 0.0
        %534 = vmatprep.subr.mxu0 0.0
        %535 = vmatpush2.msra.mxu0 0.0
        %536 = vmatprep.mubr.f32.mxu0 0.0
        %537 = vmatmul.mubr.f32.gmra.mxu0 %v441
        %v538 = vpop.f32.mrf.mxu0
        %v539 = vadd.f32 %v470, %v538
        %v540 = vpop.f32.mrf.mxu0
        %541 = vmatprep.mubr.f32.mxu0 0.0
        %542 = vmatmul.mubr.f32.gmra.mxu0 %v442
        %v543 = vpop.f32.mrf.mxu0
        %v544 = vadd.f32 %v470, %v543
        %v545 = vpop.f32.mrf.mxu0
        %546 = vmatprep.mubr.f32.mxu0 0.0
        %547 = vmatmul.mubr.f32.gmra.mxu0 %v443
        %v548 = vpop.f32.mrf.mxu0
        %v549 = vadd.f32 %v470, %v548
        %v550 = vpop.f32.mrf.mxu0
        %551 = vmatprep.mubr.f32.mxu0 0.0
        %552 = vmatmul.mubr.f32.gmra.mxu0 %v444
        %v553 = vpop.f32.mrf.mxu0
        %v554 = vadd.f32 %v470, %v553
        %v555 = vpop.f32.mrf.mxu0
        %556 = vmatprep.mubr.f32.mxu0 0.0
        %557 = vmatmul.mubr.f32.gmra.mxu0 %v445
        %v558 = vpop.f32.mrf.mxu0
        %v559 = vadd.f32 %v470, %v558
        %v560 = vpop.f32.mrf.mxu0
        %561 = vmatprep.mubr.f32.mxu0 0.0
        %562 = vmatmul.mubr.f32.gmra.mxu0 %v446
        %v563 = vpop.f32.mrf.mxu0
        %v564 = vadd.f32 %v470, %v563
        %v565 = vpop.f32.mrf.mxu0
        %566 = vmatprep.mubr.f32.mxu0 0.0
        %567 = vmatmul.mubr.f32.gmra.mxu0 %v447
        %v568 = vpop.f32.mrf.mxu0
        %v569 = vadd.f32 %v470, %v568
        %v570 = vpop.f32.mrf.mxu0
        %571 = vmatprep.mubr.f32.mxu0 0.0
        %572 = vmatmul.mubr.f32.gmra.mxu0 %v448
        %v573 = vpop.f32.mrf.mxu0
        %v574 = vadd.f32 %v470, %v573
        %v575 = vpop.f32.mrf.mxu0
        %576 = vdwg.mxu0
        %v577 = vmax.f32 %v539, 0.0
        %v578 = vmax.f32 %v544, 0.0
        %v579 = vmax.f32 %v549, 0.0
        %v580 = vmax.f32 %v554, 0.0
        %v581 = vmax.f32 %v559, 0.0
        %v582 = vmax.f32 %v564, 0.0
        %v583 = vmax.f32 %v569, 0.0
        %v584 = vmax.f32 %v574, 0.0
        %v585 = vld [vmem:[#allocation2] sm:$0xff]
        %v586 = vld [vmem:[#allocation2 + $0x8] sm:$0xff]
        %v587 = vld [vmem:[#allocation2 + $0x10] sm:$0xff]
        %v588 = vld [vmem:[#allocation2 + $0x18] sm:$0xff]
        %v589 = vld [vmem:[#allocation2 + $0x20] sm:$0xff]
        %v590 = vld [vmem:[#allocation2 + $0x28] sm:$0xff]
        %v591 = vld [vmem:[#allocation2 + $0x30] sm:$0xff]
        %v592 = vld [vmem:[#allocation2 + $0x38] sm:$0xff]
        %v593 = vld [vmem:[#allocation2 + $0x40] sm:$0xff]
        %v594 = vld [vmem:[#allocation2 + $0x48] sm:$0xff]
        %v595 = vld [vmem:[#allocation2 + $0x50] sm:$0xff]
        %v596 = vld [vmem:[#allocation2 + $0x58] sm:$0xff]
        %v597 = vld [vmem:[#allocation2 + $0x60] sm:$0xff]
        %v598 = vld [vmem:[#allocation2 + $0x68] sm:$0xff]
        %v599 = vld [vmem:[#allocation2 + $0x70] sm:$0xff]
        %v600 = vld [vmem:[#allocation2 + $0x78] sm:$0xff]
        %v601 = vld [vmem:[%s6] sm:$0x1]
        %v603 = vlaneseq
        %v604 = vshrl.u32 %v603, 7
        %v605 = vsub.s32 0, %v604
        %v606 = vrot.slane %v601, %v605
        %608 = vmatprep.subr.mxu0 0.0
        %609 = vmatpush1.msra.mxu0 %v600
        %610 = vmatprep.subr.mxu0 0.0
        %611 = vmatpush1.msra.mxu0 %v599
        %612 = vmatprep.subr.mxu0 0.0
        %613 = vmatpush1.msra.mxu0 %v598
        %614 = vmatprep.subr.mxu0 0.0
        %615 = vmatpush1.msra.mxu0 %v597
        %616 = vmatprep.subr.mxu0 0.0
        %617 = vmatpush1.msra.mxu0 %v596
        %618 = vmatprep.subr.mxu0 0.0
        %619 = vmatpush1.msra.mxu0 %v595
        %620 = vmatprep.subr.mxu0 0.0
        %621 = vmatpush1.msra.mxu0 %v594
        %622 = vmatprep.subr.mxu0 0.0
        %623 = vmatpush1.msra.mxu0 %v593
        %624 = vmatprep.subr.mxu0 0.0
        %625 = vmatpush1.msra.mxu0 %v592
        %626 = vmatprep.subr.mxu0 0.0
        %627 = vmatpush1.msra.mxu0 %v591
        %628 = vmatprep.subr.mxu0 0.0
        %629 = vmatpush1.msra.mxu0 %v590
        %630 = vmatprep.subr.mxu0 0.0
        %631 = vmatpush1.msra.mxu0 %v589
        %632 = vmatprep.subr.mxu0 0.0
        %633 = vmatpush1.msra.mxu0 %v588
        %634 = vmatprep.subr.mxu0 0.0
        %635 = vmatpush1.msra.mxu0 %v587
        %636 = vmatprep.subr.mxu0 0.0
        %637 = vmatpush1.msra.mxu0 %v586
        %638 = vmatprep.subr.mxu0 0.0
        %639 = vmatpush1.msra.mxu0 %v585
        %640 = vmatprep.subr.mxu0 0.0
        %641 = vmatpush2.msra.mxu0 0.0
        %642 = vmatprep.subr.mxu0 0.0
        %643 = vmatpush2.msra.mxu0 0.0
        %644 = vmatprep.subr.mxu0 0.0
        %645 = vmatpush2.msra.mxu0 0.0
        %646 = vmatprep.subr.mxu0 0.0
        %647 = vmatpush2.msra.mxu0 0.0
        %648 = vmatprep.subr.mxu0 0.0
        %649 = vmatpush2.msra.mxu0 0.0
        %650 = vmatprep.subr.mxu0 0.0
        %651 = vmatpush2.msra.mxu0 0.0
        %652 = vmatprep.subr.mxu0 0.0
        %653 = vmatpush2.msra.mxu0 0.0
        %654 = vmatprep.subr.mxu0 0.0
        %655 = vmatpush2.msra.mxu0 0.0
        %656 = vmatprep.subr.mxu0 0.0
        %657 = vmatpush2.msra.mxu0 0.0
        %658 = vmatprep.subr.mxu0 0.0
        %659 = vmatpush2.msra.mxu0 0.0
        %660 = vmatprep.subr.mxu0 0.0
        %661 = vmatpush2.msra.mxu0 0.0
        %662 = vmatprep.subr.mxu0 0.0
        %663 = vmatpush2.msra.mxu0 0.0
        %664 = vmatprep.subr.mxu0 0.0
        %665 = vmatpush2.msra.mxu0 0.0
        %666 = vmatprep.subr.mxu0 0.0
        %667 = vmatpush2.msra.mxu0 0.0
        %668 = vmatprep.subr.mxu0 0.0
        %669 = vmatpush2.msra.mxu0 0.0
        %670 = vmatprep.subr.mxu0 0.0
        %671 = vmatpush2.msra.mxu0 0.0
        %672 = vmatprep.mubr.f32.mxu0 0.0
        %673 = vmatmul.mubr.f32.gmra.mxu0 %v577
        %v674 = vpop.f32.mrf.mxu0
        %v675 = vadd.f32 %v606, %v674
        %v676 = vpop.f32.mrf.mxu0
        %677 = vmatprep.mubr.f32.mxu0 0.0
        %678 = vmatmul.mubr.f32.gmra.mxu0 %v578
        %v679 = vpop.f32.mrf.mxu0
        %v680 = vadd.f32 %v606, %v679
        %v681 = vpop.f32.mrf.mxu0
        %682 = vmatprep.mubr.f32.mxu0 0.0
        %683 = vmatmul.mubr.f32.gmra.mxu0 %v579
        %v684 = vpop.f32.mrf.mxu0
        %v685 = vadd.f32 %v606, %v684
        %v686 = vpop.f32.mrf.mxu0
        %687 = vmatprep.mubr.f32.mxu0 0.0
        %688 = vmatmul.mubr.f32.gmra.mxu0 %v580
        %v689 = vpop.f32.mrf.mxu0
        %v690 = vadd.f32 %v606, %v689
        %v691 = vpop.f32.mrf.mxu0
        %692 = vmatprep.mubr.f32.mxu0 0.0
        %693 = vmatmul.mubr.f32.gmra.mxu0 %v581
        %v694 = vpop.f32.mrf.mxu0
        %v695 = vadd.f32 %v606, %v694
        %v696 = vpop.f32.mrf.mxu0
        %697 = vmatprep.mubr.f32.mxu0 0.0
        %698 = vmatmul.mubr.f32.gmra.mxu0 %v582
        %v699 = vpop.f32.mrf.mxu0
        %v700 = vadd.f32 %v606, %v699
        %v701 = vpop.f32.mrf.mxu0
        %702 = vmatprep.mubr.f32.mxu0 0.0
        %703 = vmatmul.mubr.f32.gmra.mxu0 %v583
        %v704 = vpop.f32.mrf.mxu0
        %v705 = vadd.f32 %v606, %v704
        %v706 = vpop.f32.mrf.mxu0
        %707 = vmatprep.mubr.f32.mxu0 0.0
        %708 = vmatmul.mubr.f32.gmra.mxu0 %v584
        %v709 = vpop.f32.mrf.mxu0
        %v710 = vadd.f32 %v606, %v709
        %v711 = vpop.f32.mrf.mxu0
        %712 = vdwg.mxu0
        %713 = vst [vmem:[%s287] sm:$0xff] %v675
        %714 = vst [vmem:[%s287 + $0x8] sm:$0xff] %v680
        %715 = vst [vmem:[%s287 + $0x10] sm:$0xff] %v685
        %716 = vst [vmem:[%s287 + $0x18] sm:$0xff] %v690
        %717 = vst [vmem:[%s287 + $0x20] sm:$0xff] %v695
        %718 = vst [vmem:[%s287 + $0x28] sm:$0xff] %v700
        %719 = vst [vmem:[%s287 + $0x30] sm:$0xff] %v705
        %720 = vst [vmem:[%s287 + $0x38] sm:$0xff] %v710
        %s721 = sand.u32 %s182, 1
        %s722 = scalar_lea.sflag [#allocation4], %s721
        %s723 = sand.u32 %s182, 1
        %s724 = smul.addr %s723, 64
        %s725 = scalar_lea.vmem [#allocation5], %s724
        // Predicated region
        $region53: #{tpu_custom_call.1} parent=47 // pred_check
          %p726 = pneg %p192
        $region54: #{tpu_custom_call.1} parent=47 // pred_check_branch
          %728 = sbr.rel (%p726) target = $region56
        $region55: #{tpu_custom_call.1} parent=47 // pred_region
          %s729 = smul.u32 8, %s22
          %s731 = ssub.s32 1024, 1024
          %732 = vsyncadd %s722, %s731
          %s733 = smul.addr %s729, 128
          %s734 = scalar_lea.hbm %s7, %s733
          %s735 = sshll.u32 %s725, 4
          %s736 = int_to_ptr.vmem [resolvable:$true] %s735
          %741 = dma.vmem_to_hbm [thread:$0]  %s736, 1024, %s734, %s722, 128, 128, 8
        $region56: #{tpu_custom_call.1} parent=47 // pred_fallthru
          _
      $region48: #{tpu_custom_call.1} parent=5 // pred_fallthru
        _
      %p742 = scmp.le.s32.totalorder 2, %s17
      // Predicated region
      $region57: #{tpu_custom_call.1} parent=5 // pred_check
        %p743 = pneg %p742
      $region58: #{tpu_custom_call.1} parent=5 // pred_check_branch
        %745 = sbr.rel (%p743) target = $region60
      $region59: #{tpu_custom_call.1} parent=5 // pred_region
        %s746 = ssub.s32 %s17, 2
        // Predicated region
        $region61: #{tpu_custom_call.1} parent=59 // pred_check
          %p747 = pneg %p198
        $region62: #{tpu_custom_call.1} parent=59 // pred_check_branch
          %749 = sbr.rel (%p747) target = $region64
        $region63: #{tpu_custom_call.1} parent=59 // pred_region
          %s750 = sand.u32 %s183, 1
          %s751 = scalar_lea.sflag [#allocation4], %s750
          %s752 = sand.u32 %s183, 1
          %s753 = smul.addr %s752, 64
          %s754 = scalar_lea.vmem [#allocation5], %s753
          %755 = dma.done %s751, 1024
        $region64: #{tpu_custom_call.1} parent=59 // pred_fallthru
          _
      $region60: #{tpu_custom_call.1} parent=5 // pred_fallthru
        _
    $region6: #{tpu_custom_call.1} parent=1 // loop_footer
      %s21 = sadd.s32 1, %s17
    $region7: #{tpu_custom_call.1} parent=1 // loop_footer_branch
      %16 = sbr.rel target = $region3
    $region8: #{tpu_custom_call.1} parent=1 // loop_exit
      _
    %756 = vsyncpa [#allocation3], 1
    %s757 = scalar_lea.sflag [#allocation3], 1
    %758 = vsyncpa %s757, 1
    %759 = vsyncpa [#allocation4], 1
    %s760 = scalar_lea.sflag [#allocation4], 1
    %761 = vsyncpa %s760, 1

</llo_original>
